<compile_context>
chip_gen: v7x
topology: tpu7x:2x2x1
jax: 0.10.0
libtpu: 0.0.40
codegen_flags: <defaults>
</compile_context>

<pallas_src>
import functools

import jax
import jax.numpy as jnp
from jax.experimental import pallas as pl
from jax.experimental.pallas import tpu as pltpu

# ---- model hyper-parameters (small, consistent with the module) -------------
B, C, H, W = 2, 4, 16, 16          # input  (NCHW)
IN_FLAT = C * H * W                # 1024
FEATURE_NUM = 512
BOTTLE_NECK = 128
FC_LAYER_NUM = 2
CONTEXT_DIM = 32
# prob_drop is irrelevant in eval mode (Dropout == identity).
# TODO(synk): pretrained_clf is an external injected module; modeled here as a single
#             linear feature extractor (1024 -> feature_num=512).  Folding it into fc[0]
#             is only valid while that stand-in stays linear with no intermediate
#             activation.
# TODO(synk): if this predictor is called repeatedly per step/token, add a leading grid
#             axis (constant index_map for the weight slab) so weights stay VMEM-resident
#             across calls and the batch/call axis can shard across v7x's 2 TensorCores.


def _mlp_kernel(x_ref, w_ref, b_ref, out_ref, *, fc_layer_num):
    """x_ref: (Bp, 1024) bf16; w_ref: (1024+L*128+128, 128) bf16; b_ref: (L+2, 128) f32."""
    x = x_ref[...]                                           # (Bp, 1024) bf16

    # fused [pretrained_clf stand-in + fc[0]] : x @ W_fused + b_fused, then ReLU
    h = jnp.dot(x, w_ref[:IN_FLAT, :],
                preferred_element_type=jnp.float32) + b_ref[0:1, :]
    h = jnp.maximum(h, 0.0)                                  # (Bp, 128) f32

    # fc_layer_num hidden layers: Linear(bottle_neck, bottle_neck) + ReLU (+ Dropout id)
    for i in range(fc_layer_num):
        lo = IN_FLAT + i * BOTTLE_NECK
        h = jnp.dot(h.astype(jnp.bfloat16), w_ref[lo:lo + BOTTLE_NECK, :],
                    preferred_element_type=jnp.float32) + b_ref[1 + i:2 + i, :]
        h = jnp.maximum(h, 0.0)

    # predictor: Linear(bottle_neck, context_dim); weight/bias zero-padded to 128 cols,
    # only the first CONTEXT_DIM lanes are real.  (no tanh in forward)
    lo = IN_FLAT + fc_layer_num * BOTTLE_NECK
    out = jnp.dot(h.astype(jnp.bfloat16), w_ref[lo:lo + BOTTLE_NECK, :],
                  preferred_element_type=jnp.float32) \
        + b_ref[fc_layer_num + 1:fc_layer_num + 2, :]
    out_ref[...] = out[:, :CONTEXT_DIM].astype(out_ref.dtype)


def prepare_kernel_params(params):
    """One-time prep: fold feature extractor into fc[0]; pack all weights into one bf16
    slab and all biases into one f32 slab (predictor padded 32 -> 128 cols)."""
    w_fused = jnp.dot(params["w_feat"], params["w0"],
                      preferred_element_type=jnp.float32)               # (1024, 128)
    b_fused = (jnp.dot(params["b_feat"], params["w0"],
                       preferred_element_type=jnp.float32)
               + params["b0"])                                          # (1, 128)
    w_pred_p = jnp.pad(params["w_pred"],
                       ((0, 0), (0, BOTTLE_NECK - CONTEXT_DIM)))        # (128, 128)
    b_pred_p = jnp.pad(params["b_pred"],
                       ((0, 0), (0, BOTTLE_NECK - CONTEXT_DIM)))        # (1, 128)

    w_slab = jnp.concatenate(
        [w_fused,
         params["w_hidden"].reshape(FC_LAYER_NUM * BOTTLE_NECK, BOTTLE_NECK),
         w_pred_p], axis=0).astype(jnp.bfloat16)   # (1024 + L*128 + 128, 128) bf16
    b_slab = jnp.concatenate(
        [b_fused,
         params["b_hidden"].reshape(FC_LAYER_NUM, BOTTLE_NECK),
         b_pred_p], axis=0).astype(jnp.float32)    # (L + 2, 128) f32
    return {"w_slab": w_slab, "b_slab": b_slab}


def predictor_net_forward(x_nchw, kparams):
    """x_nchw: (B, C, H, W) float32 -> (B, CONTEXT_DIM) float32."""
    b = x_nchw.shape[0]
    x_flat = x_nchw.reshape(b, -1)                 # glue: flatten NCHW row-major
    # Pad batch to a multiple of 8 so loads/stores are sublane-aligned.
    bp = max(8, ((b + 7) // 8) * 8)
    if bp != b:
        x_flat = jnp.pad(x_flat, ((0, bp - b), (0, 0)))
    x_flat = x_flat.astype(jnp.bfloat16)           # halve the activation DMA

    w_slab, b_slab = kparams["w_slab"], kparams["b_slab"]
    flops = 2 * bp * (IN_FLAT * BOTTLE_NECK
                      + FC_LAYER_NUM * BOTTLE_NECK * BOTTLE_NECK
                      + BOTTLE_NECK * BOTTLE_NECK)          # predictor padded to 128
    cost = pl.CostEstimate(
        flops=flops,
        transcendentals=0,
        bytes_accessed=(w_slab.size * 2 + b_slab.size * 4
                        + x_flat.size * 2 + bp * CONTEXT_DIM * 4),
    )

    vmem = pl.BlockSpec(memory_space=pltpu.MemorySpace.VMEM)
    kernel = functools.partial(_mlp_kernel, fc_layer_num=FC_LAYER_NUM)

    out = pl.pallas_call(
        kernel,
        out_shape=jax.ShapeDtypeStruct((bp, CONTEXT_DIM), jnp.float32),
        in_specs=[vmem, vmem, vmem],
        out_specs=vmem,
        cost_estimate=cost,
    )(x_flat, w_slab, b_slab)
    return out[:b]


def init_params(key):
    """Original (unfused, f32) module parameters."""
    ks = jax.random.split(key, 8)
    scale = 0.02
    return {
        # stand-in pretrained classifier
        "w_feat": scale * jax.random.normal(ks[0], (IN_FLAT, FEATURE_NUM), jnp.float32),
        "b_feat": scale * jax.random.normal(ks[1], (1, FEATURE_NUM), jnp.float32),
        # fc[0]
        "w0": scale * jax.random.normal(ks[2], (FEATURE_NUM, BOTTLE_NECK), jnp.float32),
        "b0": scale * jax.random.normal(ks[3], (1, BOTTLE_NECK), jnp.float32),
        # stacked hidden fc layers
        "w_hidden": scale * jax.random.normal(
            ks[4], (FC_LAYER_NUM, BOTTLE_NECK, BOTTLE_NECK), jnp.float32),
        "b_hidden": scale * jax.random.normal(
            ks[5], (FC_LAYER_NUM, 1, BOTTLE_NECK), jnp.float32),
        # predictor
        "w_pred": scale * jax.random.normal(ks[6], (BOTTLE_NECK, CONTEXT_DIM), jnp.float32),
        "b_pred": scale * jax.random.normal(ks[7], (1, CONTEXT_DIM), jnp.float32),
    }


def reference_forward(x_nchw, params):
    """Pure-JAX reference of the original module forward (f32, unfused)."""
    x = x_nchw.reshape(x_nchw.shape[0], -1)
    feat = x @ params["w_feat"] + params["b_feat"]
    h = jnp.maximum(feat @ params["w0"] + params["b0"], 0.0)
    for i in range(FC_LAYER_NUM):
        h = jnp.maximum(h @ params["w_hidden"][i] + params["b_hidden"][i], 0.0)
    return h @ params["w_pred"] + params["b_pred"]


if __name__ == "__main__":
    key = jax.random.PRNGKey(0)
    kx, kp = jax.random.split(key)
    x = jax.random.normal(kx, (B, C, H, W), jnp.float32)
    params = init_params(kp)
    kparams = prepare_kernel_params(params)

    out = predictor_net_forward(x, kparams)
    out = jax.block_until_ready(out)

    ref = reference_forward(x, params)
    assert out.shape == (B, CONTEXT_DIM), out.shape
    # Tolerance covers bf16 quantization of x and of the (folded) weights; all matmul
    # accumulation is f32.
    assert jnp.allclose(out, ref, atol=1e-2, rtol=1e-2), \
        float(jnp.max(jnp.abs(out - ref)))

    print("KERNEL_OK")
</pallas_src>

<mosaic_0001>
module attributes {stable_mosaic.version = 11 : i64} {
  func.func @_mlp_kernel(%arg0: memref<8x1024xbf16, #tpu.memory_space<vmem>>, %arg1: memref<1408x128xbf16, #tpu.memory_space<vmem>>, %arg2: memref<4x128xf32, #tpu.memory_space<vmem>>, %arg3: memref<8x32xf32, #tpu.memory_space<vmem>>) attributes {dimension_semantics = [], scalar_prefetch = 0 : i64, scratch_operands = 0 : i64, tpu.core_type = #tpu.core_type<tc>} {
    %c0 = arith.constant 0 : index
    %c0_0 = arith.constant 0 : index
    %0 = vector.load %arg0[%c0, %c0_0] : memref<8x1024xbf16, #tpu.memory_space<vmem>>, vector<8x1024xbf16>
    %c0_1 = arith.constant 0 : index
    %c0_2 = arith.constant 0 : index
    %1 = vector.load %arg1[%c0_1, %c0_2] : memref<1408x128xbf16, #tpu.memory_space<vmem>>, vector<1024x128xbf16>
    %cst = arith.constant dense<0.000000e+00> : vector<8x128xf32>
    %2 = tpu.matmul %0, %1, %cst {dimension_numbers = #tpu.dot_dimension_numbers<[1], [0], [0], [1], [0, 0, 1, 1], [], []>} : vector<8x1024xbf16>, vector<1024x128xbf16>, vector<8x128xf32> -> vector<8x128xf32>
    %c0_3 = arith.constant 0 : index
    %c0_4 = arith.constant 0 : index
    %3 = vector.load %arg2[%c0_3, %c0_4] : memref<4x128xf32, #tpu.memory_space<vmem>>, vector<1x128xf32>
    %4 = vector.broadcast %3 : vector<1x128xf32> to vector<8x128xf32>
    %5 = arith.addf %2, %4 : vector<8x128xf32>
    %cst_5 = arith.constant 0.000000e+00 : f32
    %6 = vector.broadcast %cst_5 : f32 to vector<8x128xf32>
    %7 = arith.maximumf %5, %6 : vector<8x128xf32>
    %8 = arith.truncf %7 : vector<8x128xf32> to vector<8x128xbf16>
    %c1024 = arith.constant 1024 : index
    %c0_6 = arith.constant 0 : index
    %9 = vector.load %arg1[%c1024, %c0_6] : memref<1408x128xbf16, #tpu.memory_space<vmem>>, vector<128x128xbf16>
    %cst_7 = arith.constant dense<0.000000e+00> : vector<8x128xf32>
    %10 = tpu.matmul %8, %9, %cst_7 {dimension_numbers = #tpu.dot_dimension_numbers<[1], [0], [0], [1], [0, 0, 1, 1], [], []>} : vector<8x128xbf16>, vector<128x128xbf16>, vector<8x128xf32> -> vector<8x128xf32>
    %c1 = arith.constant 1 : index
    %c0_8 = arith.constant 0 : index
    %11 = vector.load %arg2[%c1, %c0_8] : memref<4x128xf32, #tpu.memory_space<vmem>>, vector<1x128xf32>
    %12 = vector.broadcast %11 : vector<1x128xf32> to vector<8x128xf32>
    %13 = arith.addf %10, %12 : vector<8x128xf32>
    %cst_9 = arith.constant 0.000000e+00 : f32
    %14 = vector.broadcast %cst_9 : f32 to vector<8x128xf32>
    %15 = arith.maximumf %13, %14 : vector<8x128xf32>
    %16 = arith.truncf %15 : vector<8x128xf32> to vector<8x128xbf16>
    %c1152 = arith.constant 1152 : index
    %c0_10 = arith.constant 0 : index
    %17 = vector.load %arg1[%c1152, %c0_10] : memref<1408x128xbf16, #tpu.memory_space<vmem>>, vector<128x128xbf16>
    %cst_11 = arith.constant dense<0.000000e+00> : vector<8x128xf32>
    %18 = tpu.matmul %16, %17, %cst_11 {dimension_numbers = #tpu.dot_dimension_numbers<[1], [0], [0], [1], [0, 0, 1, 1], [], []>} : vector<8x128xbf16>, vector<128x128xbf16>, vector<8x128xf32> -> vector<8x128xf32>
    %c2 = arith.constant 2 : index
    %c0_12 = arith.constant 0 : index
    %19 = vector.load %arg2[%c2, %c0_12] : memref<4x128xf32, #tpu.memory_space<vmem>>, vector<1x128xf32>
    %20 = vector.broadcast %19 : vector<1x128xf32> to vector<8x128xf32>
    %21 = arith.addf %18, %20 : vector<8x128xf32>
    %cst_13 = arith.constant 0.000000e+00 : f32
    %22 = vector.broadcast %cst_13 : f32 to vector<8x128xf32>
    %23 = arith.maximumf %21, %22 : vector<8x128xf32>
    %24 = arith.truncf %23 : vector<8x128xf32> to vector<8x128xbf16>
    %c1280 = arith.constant 1280 : index
    %c0_14 = arith.constant 0 : index
    %25 = vector.load %arg1[%c1280, %c0_14] : memref<1408x128xbf16, #tpu.memory_space<vmem>>, vector<128x128xbf16>
    %cst_15 = arith.constant dense<0.000000e+00> : vector<8x128xf32>
    %26 = tpu.matmul %24, %25, %cst_15 {dimension_numbers = #tpu.dot_dimension_numbers<[1], [0], [0], [1], [0, 0, 1, 1], [], []>} : vector<8x128xbf16>, vector<128x128xbf16>, vector<8x128xf32> -> vector<8x128xf32>
    %c3 = arith.constant 3 : index
    %c0_16 = arith.constant 0 : index
    %27 = vector.load %arg2[%c3, %c0_16] : memref<4x128xf32, #tpu.memory_space<vmem>>, vector<1x128xf32>
    %28 = vector.broadcast %27 : vector<1x128xf32> to vector<8x128xf32>
    %29 = arith.addf %26, %28 : vector<8x128xf32>
    %30 = vector.extract_strided_slice %29 {offsets = [0, 0], sizes = [8, 32], strides = [1, 1]} : vector<8x128xf32> to vector<8x32xf32>
    %c0_17 = arith.constant 0 : index
    %c0_18 = arith.constant 0 : index
    %31 = vector.load %arg3[%c0_17, %c0_18] : memref<8x32xf32, #tpu.memory_space<vmem>>, vector<8x32xf32>
    tpu.vector_store %arg3[%c0_17, %c0_18], %30 {strides = array<i32>} : memref<8x32xf32, #tpu.memory_space<vmem>>, vector<8x32xf32>,
    return
  }
}

</mosaic_0001>

<llo_original>
// kernel: tpu_custom_call.1
$region0: #{tpu_custom_call.1}
  #allocation0 [shape = 'u32[]', space=smem, size = 0x4, offset = 0x4, fixed_abs, tag = 'smem constant byte address 0x4 - core index']
  #allocation1 [shape = 'u32[144,128]{1,0:T(1,128)}', space=vmem, size = 0x12000, scoped, tag = 'internal scratch']
  %s0 = inlined_call_operand.hbm [shape: bf16[8,1024], index: 0, kind: input, shape index: {}]
  %s1 = inlined_call_operand.hbm [shape: bf16[1408,128], index: 1, kind: input, shape index: {}]
  %s2 = inlined_call_operand.vmem [shape: f32[4,128], index: 2, kind: input, shape index: {}]
  %s3 = inlined_call_operand.hbm [shape: f32[8,32], index: 3, kind: output, shape index: {}]
  %s4 = sld [smem:[#allocation0]]
  $region30: #{tpu_custom_call.1} parent=0
    _
  %s6 = ssub.s32 1, %s4
  %s7 = scalar_select 0, %s6, %s4
  $region1: #{tpu_custom_call.1} parent=0
    #allocation2 [shape = 'u8[16384]{0}', space=vmem, size = 0x4000, scoped, tag = 'input window, operand 0, single buffered']
    #allocation3 [shape = 's32[1]{0}', space=sflag, size = 0x4, scoped, tag = 'scoped memory for tpu_custom_call.1']
    #allocation4 [shape = 's32[1]{0}', space=sflag, size = 0x4, scoped, tag = 'scoped memory for tpu_custom_call.1']
    #allocation5 [shape = 'u8[360448]{0}', space=vmem, size = 0x58000, scoped, tag = 'input window, operand 1, single buffered']
    #allocation6 [shape = 's32[1]{0}', space=sflag, size = 0x4, scoped, tag = 'scoped memory for tpu_custom_call.1']
    #allocation7 [shape = 'u8[4096]{0}', space=vmem, size = 0x1000, scoped, tag = 'output window, operand 0, single buffered']
    %8 = vsyncpa [#allocation3], 0
    %9 = vsyncpa [#allocation6], 0
    %10 = vsyncpa [#allocation4], 0
    // Predicated region
    $region2: #{tpu_custom_call.1} parent=1 // pred_check
      _
    $region3: #{tpu_custom_call.1} parent=1 // pred_check_branch
      %12 = sbr.rel (0) target = $region5
    $region4: #{tpu_custom_call.1} parent=1 // pred_region
      %s14 = ssub.s32 512, 512
      %15 = vsyncadd [#allocation3], %s14
      %s17 = sshll.u32 [#allocation2], 4
      %s18 = int_to_ptr.vmem [resolvable:$true] %s17
      %20 = dma.hbm_to_vmem [thread:$0]  %s0, 512, %s18, [#allocation3]
    $region5: #{tpu_custom_call.1} parent=1 // pred_fallthru
      _
    // Predicated region
    $region6: #{tpu_custom_call.1} parent=1 // pred_check
      _
    $region7: #{tpu_custom_call.1} parent=1 // pred_check_branch
      %22 = sbr.rel (0) target = $region9
    $region8: #{tpu_custom_call.1} parent=1 // pred_region
      %s24 = ssub.s32 11264, 11264
      %25 = vsyncadd [#allocation6], %s24
      %s26 = sshll.u32 [#allocation5], 4
      %s27 = int_to_ptr.vmem [resolvable:$true] %s26
      %32 = dma.hbm_to_vmem [thread:$0]  %s1, 11264, %s27, [#allocation6], 64, 64, 4
    $region9: #{tpu_custom_call.1} parent=1 // pred_fallthru
      _
    // Predicated region
    $region10: #{tpu_custom_call.1} parent=1 // pred_check
      _
    $region11: #{tpu_custom_call.1} parent=1 // pred_check_branch
      %34 = sbr.rel (0) target = $region13
    $region12: #{tpu_custom_call.1} parent=1 // pred_region
      _
    $region13: #{tpu_custom_call.1} parent=1 // pred_fallthru
      _
    // Predicated region
    $region14: #{tpu_custom_call.1} parent=1 // pred_check
      _
    $region15: #{tpu_custom_call.1} parent=1 // pred_check_branch
      %36 = sbr.rel (0) target = $region17
    $region16: #{tpu_custom_call.1} parent=1 // pred_region
      %37 = dma.done [#allocation3], 512
    $region17: #{tpu_custom_call.1} parent=1 // pred_fallthru
      _
    // Predicated region
    $region18: #{tpu_custom_call.1} parent=1 // pred_check
      _
    $region19: #{tpu_custom_call.1} parent=1 // pred_check_branch
      %39 = sbr.rel (0) target = $region21
    $region20: #{tpu_custom_call.1} parent=1 // pred_region
      %40 = dma.done [#allocation6], 11264
    $region21: #{tpu_custom_call.1} parent=1 // pred_fallthru
      _
    %v42 = vld [vmem:[#allocation2] sm:$0xff]
    %v43 = vld [vmem:[#allocation2 + $0x8] sm:$0xff]
    %v44 = vld [vmem:[#allocation2 + $0x10] sm:$0xff]
    %v45 = vld [vmem:[#allocation2 + $0x18] sm:$0xff]
    %v46 = vld [vmem:[#allocation5] sm:$0xf]
    %v47 = vld [vmem:[#allocation5 + $0x4] sm:$0xf]
    %v48 = vld [vmem:[#allocation5 + $0x8] sm:$0xf]
    %v49 = vld [vmem:[#allocation5 + $0xc] sm:$0xf]
    %v50 = vld [vmem:[#allocation5 + $0x10] sm:$0xf]
    %v51 = vld [vmem:[#allocation5 + $0x14] sm:$0xf]
    %v52 = vld [vmem:[#allocation5 + $0x18] sm:$0xf]
    %v53 = vld [vmem:[#allocation5 + $0x1c] sm:$0xf]
    %v54 = vld [vmem:[#allocation5 + $0x20] sm:$0xf]
    %v55 = vld [vmem:[#allocation5 + $0x24] sm:$0xf]
    %v56 = vld [vmem:[#allocation5 + $0x28] sm:$0xf]
    %v57 = vld [vmem:[#allocation5 + $0x2c] sm:$0xf]
    %v58 = vld [vmem:[#allocation5 + $0x30] sm:$0xf]
    %v59 = vld [vmem:[#allocation5 + $0x34] sm:$0xf]
    %v60 = vld [vmem:[#allocation5 + $0x38] sm:$0xf]
    %v61 = vld [vmem:[#allocation5 + $0x3c] sm:$0xf]
    %v62 = vld [vmem:[#allocation5 + $0x40] sm:$0xf]
    %v63 = vld [vmem:[#allocation5 + $0x44] sm:$0xf]
    %v64 = vld [vmem:[#allocation5 + $0x48] sm:$0xf]
    %v65 = vld [vmem:[#allocation5 + $0x4c] sm:$0xf]
    %v66 = vld [vmem:[#allocation5 + $0x50] sm:$0xf]
    %v67 = vld [vmem:[#allocation5 + $0x54] sm:$0xf]
    %v68 = vld [vmem:[#allocation5 + $0x58] sm:$0xf]
    %v69 = vld [vmem:[#allocation5 + $0x5c] sm:$0xf]
    %v70 = vld [vmem:[#allocation5 + $0x60] sm:$0xf]
    %v71 = vld [vmem:[#allocation5 + $0x64] sm:$0xf]
    %v72 = vld [vmem:[#allocation5 + $0x68] sm:$0xf]
    %v73 = vld [vmem:[#allocation5 + $0x6c] sm:$0xf]
    %v74 = vld [vmem:[#allocation5 + $0x70] sm:$0xf]
    %v75 = vld [vmem:[#allocation5 + $0x74] sm:$0xf]
    %v76 = vld [vmem:[#allocation5 + $0x78] sm:$0xf]
    %v77 = vld [vmem:[#allocation5 + $0x7c] sm:$0xf]
    %v78 = vld [vmem:[#allocation5 + $0x80] sm:$0xf]
    %v79 = vld [vmem:[#allocation5 + $0x84] sm:$0xf]
    %v80 = vld [vmem:[#allocation5 + $0x88] sm:$0xf]
    %v81 = vld [vmem:[#allocation5 + $0x8c] sm:$0xf]
    %v82 = vld [vmem:[#allocation5 + $0x90] sm:$0xf]
    %v83 = vld [vmem:[#allocation5 + $0x94] sm:$0xf]
    %v84 = vld [vmem:[#allocation5 + $0x98] sm:$0xf]
    %v85 = vld [vmem:[#allocation5 + $0x9c] sm:$0xf]
    %v86 = vld [vmem:[#allocation5 + $0xa0] sm:$0xf]
    %v87 = vld [vmem:[#allocation5 + $0xa4] sm:$0xf]
    %v88 = vld [vmem:[#allocation5 + $0xa8] sm:$0xf]
    %v89 = vld [vmem:[#allocation5 + $0xac] sm:$0xf]
    %v90 = vld [vmem:[#allocation5 + $0xb0] sm:$0xf]
    %v91 = vld [vmem:[#allocation5 + $0xb4] sm:$0xf]
    %v92 = vld [vmem:[#allocation5 + $0xb8] sm:$0xf]
    %v93 = vld [vmem:[#allocation5 + $0xbc] sm:$0xf]
    %v94 = vld [vmem:[#allocation5 + $0xc0] sm:$0xf]
    %v95 = vld [vmem:[#allocation5 + $0xc4] sm:$0xf]
    %v96 = vld [vmem:[#allocation5 + $0xc8] sm:$0xf]
    %v97 = vld [vmem:[#allocation5 + $0xcc] sm:$0xf]
    %v98 = vld [vmem:[#allocation5 + $0xd0] sm:$0xf]
    %v99 = vld [vmem:[#allocation5 + $0xd4] sm:$0xf]
    %v100 = vld [vmem:[#allocation5 + $0xd8] sm:$0xf]
    %v101 = vld [vmem:[#allocation5 + $0xdc] sm:$0xf]
    %v102 = vld [vmem:[#allocation5 + $0xe0] sm:$0xf]
    %v103 = vld [vmem:[#allocation5 + $0xe4] sm:$0xf]
    %v104 = vld [vmem:[#allocation5 + $0xe8] sm:$0xf]
    %v105 = vld [vmem:[#allocation5 + $0xec] sm:$0xf]
    %v106 = vld [vmem:[#allocation5 + $0xf0] sm:$0xf]
    %v107 = vld [vmem:[#allocation5 + $0xf4] sm:$0xf]
    %v108 = vld [vmem:[#allocation5 + $0xf8] sm:$0xf]
    %v109 = vld [vmem:[#allocation5 + $0xfc] sm:$0xf]
    %v110 = vld [vmem:[#allocation5 + $0x100] sm:$0xf]
    %v111 = vld [vmem:[#allocation5 + $0x104] sm:$0xf]
    %v112 = vld [vmem:[#allocation5 + $0x108] sm:$0xf]
    %v113 = vld [vmem:[#allocation5 + $0x10c] sm:$0xf]
    %v114 = vld [vmem:[#allocation5 + $0x110] sm:$0xf]
    %v115 = vld [vmem:[#allocation5 + $0x114] sm:$0xf]
    %v116 = vld [vmem:[#allocation5 + $0x118] sm:$0xf]
    %v117 = vld [vmem:[#allocation5 + $0x11c] sm:$0xf]
    %v118 = vld [vmem:[#allocation5 + $0x120] sm:$0xf]
    %v119 = vld [vmem:[#allocation5 + $0x124] sm:$0xf]
    %v120 = vld [vmem:[#allocation5 + $0x128] sm:$0xf]
    %v121 = vld [vmem:[#allocation5 + $0x12c] sm:$0xf]
    %v122 = vld [vmem:[#allocation5 + $0x130] sm:$0xf]
    %v123 = vld [vmem:[#allocation5 + $0x134] sm:$0xf]
    %v124 = vld [vmem:[#allocation5 + $0x138] sm:$0xf]
    %v125 = vld [vmem:[#allocation5 + $0x13c] sm:$0xf]
    %v126 = vld [vmem:[#allocation5 + $0x140] sm:$0xf]
    %v127 = vld [vmem:[#allocation5 + $0x144] sm:$0xf]
    %v128 = vld [vmem:[#allocation5 + $0x148] sm:$0xf]
    %v129 = vld [vmem:[#allocation5 + $0x14c] sm:$0xf]
    %v130 = vld [vmem:[#allocation5 + $0x150] sm:$0xf]
    %v131 = vld [vmem:[#allocation5 + $0x154] sm:$0xf]
    %v132 = vld [vmem:[#allocation5 + $0x158] sm:$0xf]
    %v133 = vld [vmem:[#allocation5 + $0x15c] sm:$0xf]
    %v134 = vld [vmem:[#allocation5 + $0x160] sm:$0xf]
    %v135 = vld [vmem:[#allocation5 + $0x164] sm:$0xf]
    %v136 = vld [vmem:[#allocation5 + $0x168] sm:$0xf]
    %v137 = vld [vmem:[#allocation5 + $0x16c] sm:$0xf]
    %v138 = vld [vmem:[#allocation5 + $0x170] sm:$0xf]
    %v139 = vld [vmem:[#allocation5 + $0x174] sm:$0xf]
    %v140 = vld [vmem:[#allocation5 + $0x178] sm:$0xf]
    %v141 = vld [vmem:[#allocation5 + $0x17c] sm:$0xf]
    %v142 = vld [vmem:[#allocation5 + $0x180] sm:$0xf]
    %v143 = vld [vmem:[#allocation5 + $0x184] sm:$0xf]
    %v144 = vld [vmem:[#allocation5 + $0x188] sm:$0xf]
    %v145 = vld [vmem:[#allocation5 + $0x18c] sm:$0xf]
    %v146 = vld [vmem:[#allocation5 + $0x190] sm:$0xf]
    %v147 = vld [vmem:[#allocation5 + $0x194] sm:$0xf]
    %v148 = vld [vmem:[#allocation5 + $0x198] sm:$0xf]
    %v149 = vld [vmem:[#allocation5 + $0x19c] sm:$0xf]
    %v150 = vld [vmem:[#allocation5 + $0x1a0] sm:$0xf]
    %v151 = vld [vmem:[#allocation5 + $0x1a4] sm:$0xf]
    %v152 = vld [vmem:[#allocation5 + $0x1a8] sm:$0xf]
    %v153 = vld [vmem:[#allocation5 + $0x1ac] sm:$0xf]
    %v154 = vld [vmem:[#allocation5 + $0x1b0] sm:$0xf]
    %v155 = vld [vmem:[#allocation5 + $0x1b4] sm:$0xf]
    %v156 = vld [vmem:[#allocation5 + $0x1b8] sm:$0xf]
    %v157 = vld [vmem:[#allocation5 + $0x1bc] sm:$0xf]
    %v158 = vld [vmem:[#allocation5 + $0x1c0] sm:$0xf]
    %v159 = vld [vmem:[#allocation5 + $0x1c4] sm:$0xf]
    %v160 = vld [vmem:[#allocation5 + $0x1c8] sm:$0xf]
    %v161 = vld [vmem:[#allocation5 + $0x1cc] sm:$0xf]
    %v162 = vld [vmem:[#allocation5 + $0x1d0] sm:$0xf]
    %v163 = vld [vmem:[#allocation5 + $0x1d4] sm:$0xf]
    %v164 = vld [vmem:[#allocation5 + $0x1d8] sm:$0xf]
    %v165 = vld [vmem:[#allocation5 + $0x1dc] sm:$0xf]
    %v166 = vld [vmem:[#allocation5 + $0x1e0] sm:$0xf]
    %v167 = vld [vmem:[#allocation5 + $0x1e4] sm:$0xf]
    %v168 = vld [vmem:[#allocation5 + $0x1e8] sm:$0xf]
    %v169 = vld [vmem:[#allocation5 + $0x1ec] sm:$0xf]
    %v170 = vld [vmem:[#allocation5 + $0x1f0] sm:$0xf]
    %v171 = vld [vmem:[#allocation5 + $0x1f4] sm:$0xf]
    %v172 = vld [vmem:[#allocation5 + $0x1f8] sm:$0xf]
    %v173 = vld [vmem:[#allocation5 + $0x1fc] sm:$0xf]
    %v174 = vld [vmem:[%s2] sm:$0x1]
    %v175 = vlaneseq
    %v176 = vshrl.u32 %v175, 7
    %v177 = vsub.s32 0, %v176
    %v178 = vrot.slane %v174, %v177
    %v183 = vunpack.c.l.b16 %v42
    %v184 = vunpack.c.h.b16 %v42
    %v185 = vunpack.c.l.b16 %v43
    %v186 = vunpack.c.h.b16 %v43
    %v187 = vunpack.c.l.b16 %v44
    %v188 = vunpack.c.h.b16 %v44
    %v189 = vunpack.c.l.b16 %v45
    %v190 = vunpack.c.h.b16 %v45
    %v191 = vpack.c.b16 %v183, %v183
    %v192 = vpack.c.b16 %v184, %v184
    %v193 = vpack.c.b16 %v185, %v185
    %v194 = vpack.c.b16 %v186, %v186
    %v195 = vpack.c.b16 %v187, %v187
    %v196 = vpack.c.b16 %v188, %v188
    %v197 = vpack.c.b16 %v189, %v189
    %v198 = vpack.c.b16 %v190, %v190
    %v335 = vunpack.c.l.b16 %v46
    %v336 = vunpack.c.l.b16 %v47
    %v337 = vunpack.c.l.b16 %v48
    %v338 = vunpack.c.l.b16 %v49
    %v339 = vunpack.c.l.b16 %v50
    %v340 = vunpack.c.l.b16 %v51
    %v341 = vunpack.c.l.b16 %v52
    %v342 = vunpack.c.l.b16 %v53
    %v343 = vunpack.c.l.b16 %v54
    %v344 = vunpack.c.l.b16 %v55
    %v345 = vunpack.c.l.b16 %v56
    %v346 = vunpack.c.l.b16 %v57
    %v347 = vunpack.c.l.b16 %v58
    %v348 = vunpack.c.l.b16 %v59
    %v349 = vunpack.c.l.b16 %v60
    %v350 = vunpack.c.l.b16 %v61
    %v351 = vunpack.c.l.b16 %v62
    %v352 = vunpack.c.l.b16 %v63
    %v353 = vunpack.c.l.b16 %v64
    %v354 = vunpack.c.l.b16 %v65
    %v355 = vunpack.c.l.b16 %v66
    %v356 = vunpack.c.l.b16 %v67
    %v357 = vunpack.c.l.b16 %v68
    %v358 = vunpack.c.l.b16 %v69
    %v359 = vunpack.c.l.b16 %v70
    %v360 = vunpack.c.l.b16 %v71
    %v361 = vunpack.c.l.b16 %v72
    %v362 = vunpack.c.l.b16 %v73
    %v363 = vunpack.c.l.b16 %v74
    %v364 = vunpack.c.l.b16 %v75
    %v365 = vunpack.c.l.b16 %v76
    %v366 = vunpack.c.l.b16 %v77
    %v367 = vunpack.c.l.b16 %v78
    %v368 = vunpack.c.l.b16 %v79
    %v369 = vunpack.c.l.b16 %v80
    %v370 = vunpack.c.l.b16 %v81
    %v371 = vunpack.c.l.b16 %v82
    %v372 = vunpack.c.l.b16 %v83
    %v373 = vunpack.c.l.b16 %v84
    %v374 = vunpack.c.l.b16 %v85
    %v375 = vunpack.c.l.b16 %v86
    %v376 = vunpack.c.l.b16 %v87
    %v377 = vunpack.c.l.b16 %v88
    %v378 = vunpack.c.l.b16 %v89
    %v379 = vunpack.c.l.b16 %v90
    %v380 = vunpack.c.l.b16 %v91
    %v381 = vunpack.c.l.b16 %v92
    %v382 = vunpack.c.l.b16 %v93
    %v383 = vunpack.c.l.b16 %v94
    %v384 = vunpack.c.l.b16 %v95
    %v385 = vunpack.c.l.b16 %v96
    %v386 = vunpack.c.l.b16 %v97
    %v387 = vunpack.c.l.b16 %v98
    %v388 = vunpack.c.l.b16 %v99
    %v389 = vunpack.c.l.b16 %v100
    %v390 = vunpack.c.l.b16 %v101
    %v391 = vunpack.c.l.b16 %v102
    %v392 = vunpack.c.l.b16 %v103
    %v393 = vunpack.c.l.b16 %v104
    %v394 = vunpack.c.l.b16 %v105
    %v395 = vunpack.c.l.b16 %v106
    %v396 = vunpack.c.l.b16 %v107
    %v397 = vunpack.c.l.b16 %v108
    %v398 = vunpack.c.l.b16 %v109
    %v399 = vunpack.c.l.b16 %v110
    %v400 = vunpack.c.l.b16 %v111
    %v401 = vunpack.c.l.b16 %v112
    %v402 = vunpack.c.l.b16 %v113
    %v403 = vunpack.c.l.b16 %v114
    %v404 = vunpack.c.l.b16 %v115
    %v405 = vunpack.c.l.b16 %v116
    %v406 = vunpack.c.l.b16 %v117
    %v407 = vunpack.c.l.b16 %v118
    %v408 = vunpack.c.l.b16 %v119
    %v409 = vunpack.c.l.b16 %v120
    %v410 = vunpack.c.l.b16 %v121
    %v411 = vunpack.c.l.b16 %v122
    %v412 = vunpack.c.l.b16 %v123
    %v413 = vunpack.c.l.b16 %v124
    %v414 = vunpack.c.l.b16 %v125
    %v415 = vunpack.c.l.b16 %v126
    %v416 = vunpack.c.l.b16 %v127
    %v417 = vunpack.c.l.b16 %v128
    %v418 = vunpack.c.l.b16 %v129
    %v419 = vunpack.c.l.b16 %v130
    %v420 = vunpack.c.l.b16 %v131
    %v421 = vunpack.c.l.b16 %v132
    %v422 = vunpack.c.l.b16 %v133
    %v423 = vunpack.c.l.b16 %v134
    %v424 = vunpack.c.l.b16 %v135
    %v425 = vunpack.c.l.b16 %v136
    %v426 = vunpack.c.l.b16 %v137
    %v427 = vunpack.c.l.b16 %v138
    %v428 = vunpack.c.l.b16 %v139
    %v429 = vunpack.c.l.b16 %v140
    %v430 = vunpack.c.l.b16 %v141
    %v431 = vunpack.c.l.b16 %v142
    %v432 = vunpack.c.l.b16 %v143
    %v433 = vunpack.c.l.b16 %v144
    %v434 = vunpack.c.l.b16 %v145
    %v435 = vunpack.c.l.b16 %v146
    %v436 = vunpack.c.l.b16 %v147
    %v437 = vunpack.c.l.b16 %v148
    %v438 = vunpack.c.l.b16 %v149
    %v439 = vunpack.c.l.b16 %v150
    %v440 = vunpack.c.l.b16 %v151
    %v441 = vunpack.c.l.b16 %v152
    %v442 = vunpack.c.l.b16 %v153
    %v443 = vunpack.c.l.b16 %v154
    %v444 = vunpack.c.l.b16 %v155
    %v445 = vunpack.c.l.b16 %v156
    %v446 = vunpack.c.l.b16 %v157
    %v447 = vunpack.c.l.b16 %v158
    %v448 = vunpack.c.l.b16 %v159
    %v449 = vunpack.c.l.b16 %v160
    %v450 = vunpack.c.l.b16 %v161
    %v451 = vunpack.c.l.b16 %v162
    %v452 = vunpack.c.l.b16 %v163
    %v453 = vunpack.c.l.b16 %v164
    %v454 = vunpack.c.l.b16 %v165
    %v455 = vunpack.c.l.b16 %v166
    %v456 = vunpack.c.l.b16 %v167
    %v457 = vunpack.c.l.b16 %v168
    %v458 = vunpack.c.l.b16 %v169
    %v459 = vunpack.c.l.b16 %v170
    %v460 = vunpack.c.l.b16 %v171
    %v461 = vunpack.c.l.b16 %v172
    %v462 = vunpack.c.l.b16 %v173
    %v463 = vpack.c.b16 %v336, %v335
    %v464 = vpack.c.b16 %v338, %v337
    %v465 = vpack.c.b16 %v340, %v339
    %v466 = vpack.c.b16 %v342, %v341
    %v467 = vpack.c.b16 %v344, %v343
    %v468 = vpack.c.b16 %v346, %v345
    %v469 = vpack.c.b16 %v348, %v347
    %v470 = vpack.c.b16 %v350, %v349
    %v471 = vpack.c.b16 %v352, %v351
    %v472 = vpack.c.b16 %v354, %v353
    %v473 = vpack.c.b16 %v356, %v355
    %v474 = vpack.c.b16 %v358, %v357
    %v475 = vpack.c.b16 %v360, %v359
    %v476 = vpack.c.b16 %v362, %v361
    %v477 = vpack.c.b16 %v364, %v363
    %v478 = vpack.c.b16 %v366, %v365
    %v479 = vpack.c.b16 %v368, %v367
    %v480 = vpack.c.b16 %v370, %v369
    %v481 = vpack.c.b16 %v372, %v371
    %v482 = vpack.c.b16 %v374, %v373
    %v483 = vpack.c.b16 %v376, %v375
    %v484 = vpack.c.b16 %v378, %v377
    %v485 = vpack.c.b16 %v380, %v379
    %v486 = vpack.c.b16 %v382, %v381
    %v487 = vpack.c.b16 %v384, %v383
    %v488 = vpack.c.b16 %v386, %v385
    %v489 = vpack.c.b16 %v388, %v387
    %v490 = vpack.c.b16 %v390, %v389
    %v491 = vpack.c.b16 %v392, %v391
    %v492 = vpack.c.b16 %v394, %v393
    %v493 = vpack.c.b16 %v396, %v395
    %v494 = vpack.c.b16 %v398, %v397
    %v495 = vpack.c.b16 %v400, %v399
    %v496 = vpack.c.b16 %v402, %v401
    %v497 = vpack.c.b16 %v404, %v403
    %v498 = vpack.c.b16 %v406, %v405
    %v499 = vpack.c.b16 %v408, %v407
    %v500 = vpack.c.b16 %v410, %v409
    %v501 = vpack.c.b16 %v412, %v411
    %v502 = vpack.c.b16 %v414, %v413
    %v503 = vpack.c.b16 %v416, %v415
    %v504 = vpack.c.b16 %v418, %v417
    %v505 = vpack.c.b16 %v420, %v419
    %v506 = vpack.c.b16 %v422, %v421
    %v507 = vpack.c.b16 %v424, %v423
    %v508 = vpack.c.b16 %v426, %v425
    %v509 = vpack.c.b16 %v428, %v427
    %v510 = vpack.c.b16 %v430, %v429
    %v511 = vpack.c.b16 %v432, %v431
    %v512 = vpack.c.b16 %v434, %v433
    %v513 = vpack.c.b16 %v436, %v435
    %v514 = vpack.c.b16 %v438, %v437
    %v515 = vpack.c.b16 %v440, %v439
    %v516 = vpack.c.b16 %v442, %v441
    %v517 = vpack.c.b16 %v444, %v443
    %v518 = vpack.c.b16 %v446, %v445
    %v519 = vpack.c.b16 %v448, %v447
    %v520 = vpack.c.b16 %v450, %v449
    %v521 = vpack.c.b16 %v452, %v451
    %v522 = vpack.c.b16 %v454, %v453
    %v523 = vpack.c.b16 %v456, %v455
    %v524 = vpack.c.b16 %v458, %v457
    %v525 = vpack.c.b16 %v460, %v459
    %v526 = vpack.c.b16 %v462, %v461
    %591 = vmatprep.subr.bf16.mxu0 0
    %592 = vmatpush1.bf16.msra.mxu0 %v463
    %593 = vmatprep.subr.bf16.mxu0 0
    %594 = vmatpush1.bf16.msra.mxu0 %v464
    %595 = vmatprep.subr.bf16.mxu0 0
    %596 = vmatpush1.bf16.msra.mxu0 %v465
    %597 = vmatprep.subr.bf16.mxu0 0
    %598 = vmatpush1.bf16.msra.mxu0 %v466
    %599 = vmatprep.subr.bf16.mxu0 0
    %600 = vmatpush1.bf16.msra.mxu0 %v467
    %601 = vmatprep.subr.bf16.mxu0 0
    %602 = vmatpush1.bf16.msra.mxu0 %v468
    %603 = vmatprep.subr.bf16.mxu0 0
    %604 = vmatpush1.bf16.msra.mxu0 %v469
    %605 = vmatprep.subr.bf16.mxu0 0
    %606 = vmatpush1.bf16.msra.mxu0 %v470
    %607 = vmatprep.subr.bf16.mxu0 0
    %608 = vmatpush1.bf16.msra.mxu0 %v471
    %609 = vmatprep.subr.bf16.mxu0 0
    %610 = vmatpush1.bf16.msra.mxu0 %v472
    %611 = vmatprep.subr.bf16.mxu0 0
    %612 = vmatpush1.bf16.msra.mxu0 %v473
    %613 = vmatprep.subr.bf16.mxu0 0
    %614 = vmatpush1.bf16.msra.mxu0 %v474
    %615 = vmatprep.subr.bf16.mxu0 0
    %616 = vmatpush1.bf16.msra.mxu0 %v475
    %617 = vmatprep.subr.bf16.mxu0 0
    %618 = vmatpush1.bf16.msra.mxu0 %v476
    %619 = vmatprep.subr.bf16.mxu0 0
    %620 = vmatpush1.bf16.msra.mxu0 %v477
    %621 = vmatprep.subr.bf16.mxu0 0
    %622 = vmatpush1.bf16.msra.mxu0 %v478
    %623 = vmatprep.mubr.bf16.mxu0 %v192
    %624 = vmatmul.mubr.bf16.gmra.mrb[0].mxu0 %v191
    %v625 = vpop.f32.mrb[0].mxu0
    %v626 = vadd.f32 %v178, %v625
    %v627 = vpop.f32.mrb[0].mxu0
    %v628 = vpop.f32.mrb[0].mxu0
    %v629 = vpop.f32.mrb[0].mxu0
    %630 = vdwg.mxu0
    %631 = vmatprep.subr.bf16.mxu0 0
    %632 = vmatpush1.bf16.msra.mxu0 %v479
    %633 = vmatprep.subr.bf16.mxu0 0
    %634 = vmatpush1.bf16.msra.mxu0 %v480
    %635 = vmatprep.subr.bf16.mxu0 0
    %636 = vmatpush1.bf16.msra.mxu0 %v481
    %637 = vmatprep.subr.bf16.mxu0 0
    %638 = vmatpush1.bf16.msra.mxu0 %v482
    %639 = vmatprep.subr.bf16.mxu0 0
    %640 = vmatpush1.bf16.msra.mxu0 %v483
    %641 = vmatprep.subr.bf16.mxu0 0
    %642 = vmatpush1.bf16.msra.mxu0 %v484
    %643 = vmatprep.subr.bf16.mxu0 0
    %644 = vmatpush1.bf16.msra.mxu0 %v485
    %645 = vmatprep.subr.bf16.mxu0 0
    %646 = vmatpush1.bf16.msra.mxu0 %v486
    %647 = vmatprep.subr.bf16.mxu0 0
    %648 = vmatpush1.bf16.msra.mxu0 %v487
    %649 = vmatprep.subr.bf16.mxu0 0
    %650 = vmatpush1.bf16.msra.mxu0 %v488
    %651 = vmatprep.subr.bf16.mxu0 0
    %652 = vmatpush1.bf16.msra.mxu0 %v489
    %653 = vmatprep.subr.bf16.mxu0 0
    %654 = vmatpush1.bf16.msra.mxu0 %v490
    %655 = vmatprep.subr.bf16.mxu0 0
    %656 = vmatpush1.bf16.msra.mxu0 %v491
    %657 = vmatprep.subr.bf16.mxu0 0
    %658 = vmatpush1.bf16.msra.mxu0 %v492
    %659 = vmatprep.subr.bf16.mxu0 0
    %660 = vmatpush1.bf16.msra.mxu0 %v493
    %661 = vmatprep.subr.bf16.mxu0 0
    %662 = vmatpush1.bf16.msra.mxu0 %v494
    %663 = vmatprep.mubr.bf16.mxu0 %v194
    %664 = vmatmul.mubr.bf16.gmra.mrb[0].mxu0 %v193
    %v665 = vpop.f32.mrb[0].mxu0
    %v666 = vadd.f32 %v626, %v665
    %v667 = vpop.f32.mrb[0].mxu0
    %v668 = vpop.f32.mrb[0].mxu0
    %v669 = vpop.f32.mrb[0].mxu0
    %670 = vdwg.mxu0
    %671 = vmatprep.subr.bf16.mxu0 0
    %672 = vmatpush1.bf16.msra.mxu0 %v495
    %673 = vmatprep.subr.bf16.mxu0 0
    %674 = vmatpush1.bf16.msra.mxu0 %v496
    %675 = vmatprep.subr.bf16.mxu0 0
    %676 = vmatpush1.bf16.msra.mxu0 %v497
    %677 = vmatprep.subr.bf16.mxu0 0
    %678 = vmatpush1.bf16.msra.mxu0 %v498
    %679 = vmatprep.subr.bf16.mxu0 0
    %680 = vmatpush1.bf16.msra.mxu0 %v499
    %681 = vmatprep.subr.bf16.mxu0 0
    %682 = vmatpush1.bf16.msra.mxu0 %v500
    %683 = vmatprep.subr.bf16.mxu0 0
    %684 = vmatpush1.bf16.msra.mxu0 %v501
    %685 = vmatprep.subr.bf16.mxu0 0
    %686 = vmatpush1.bf16.msra.mxu0 %v502
    %687 = vmatprep.subr.bf16.mxu0 0
    %688 = vmatpush1.bf16.msra.mxu0 %v503
    %689 = vmatprep.subr.bf16.mxu0 0
    %690 = vmatpush1.bf16.msra.mxu0 %v504
    %691 = vmatprep.subr.bf16.mxu0 0
    %692 = vmatpush1.bf16.msra.mxu0 %v505
    %693 = vmatprep.subr.bf16.mxu0 0
    %694 = vmatpush1.bf16.msra.mxu0 %v506
    %695 = vmatprep.subr.bf16.mxu0 0
    %696 = vmatpush1.bf16.msra.mxu0 %v507
    %697 = vmatprep.subr.bf16.mxu0 0
    %698 = vmatpush1.bf16.msra.mxu0 %v508
    %699 = vmatprep.subr.bf16.mxu0 0
    %700 = vmatpush1.bf16.msra.mxu0 %v509
    %701 = vmatprep.subr.bf16.mxu0 0
    %702 = vmatpush1.bf16.msra.mxu0 %v510
    %703 = vmatprep.mubr.bf16.mxu0 %v196
    %704 = vmatmul.mubr.bf16.gmra.mrb[0].mxu0 %v195
    %v705 = vpop.f32.mrb[0].mxu0
    %v706 = vadd.f32 %v666, %v705
    %v707 = vpop.f32.mrb[0].mxu0
    %v708 = vpop.f32.mrb[0].mxu0
    %v709 = vpop.f32.mrb[0].mxu0
    %710 = vdwg.mxu0
    %711 = vmatprep.subr.bf16.mxu0 0
    %712 = vmatpush1.bf16.msra.mxu0 %v511
    %713 = vmatprep.subr.bf16.mxu0 0
    %714 = vmatpush1.bf16.msra.mxu0 %v512
    %715 = vmatprep.subr.bf16.mxu0 0
    %716 = vmatpush1.bf16.msra.mxu0 %v513
    %717 = vmatprep.subr.bf16.mxu0 0
    %718 = vmatpush1.bf16.msra.mxu0 %v514
    %719 = vmatprep.subr.bf16.mxu0 0
    %720 = vmatpush1.bf16.msra.mxu0 %v515
    %721 = vmatprep.subr.bf16.mxu0 0
    %722 = vmatpush1.bf16.msra.mxu0 %v516
    %723 = vmatprep.subr.bf16.mxu0 0
    %724 = vmatpush1.bf16.msra.mxu0 %v517
    %725 = vmatprep.subr.bf16.mxu0 0
    %726 = vmatpush1.bf16.msra.mxu0 %v518
    %727 = vmatprep.subr.bf16.mxu0 0
    %728 = vmatpush1.bf16.msra.mxu0 %v519
    %729 = vmatprep.subr.bf16.mxu0 0
    %730 = vmatpush1.bf16.msra.mxu0 %v520
    %731 = vmatprep.subr.bf16.mxu0 0
    %732 = vmatpush1.bf16.msra.mxu0 %v521
    %733 = vmatprep.subr.bf16.mxu0 0
    %734 = vmatpush1.bf16.msra.mxu0 %v522
    %735 = vmatprep.subr.bf16.mxu0 0
    %736 = vmatpush1.bf16.msra.mxu0 %v523
    %737 = vmatprep.subr.bf16.mxu0 0
    %738 = vmatpush1.bf16.msra.mxu0 %v524
    %739 = vmatprep.subr.bf16.mxu0 0
    %740 = vmatpush1.bf16.msra.mxu0 %v525
    %741 = vmatprep.subr.bf16.mxu0 0
    %742 = vmatpush1.bf16.msra.mxu0 %v526
    %743 = vmatprep.mubr.bf16.mxu0 %v198
    %744 = vmatmul.mubr.bf16.gmra.mrb[0].mxu0 %v197
    %v745 = vpop.f32.mrb[0].mxu0
    %v746 = vadd.f32 %v706, %v745
    %v747 = vpop.f32.mrb[0].mxu0
    %v748 = vpop.f32.mrb[0].mxu0
    %v749 = vpop.f32.mrb[0].mxu0
    %750 = vdwg.mxu0
    %v751 = vmax.f32 %v746, 0.0
    %v752 = vpack.c.bf16 %v751, %v751
    %v753 = vld [vmem:[#allocation5 + $0x200] sm:$0xf]
    %v754 = vld [vmem:[#allocation5 + $0x204] sm:$0xf]
    %v755 = vld [vmem:[#allocation5 + $0x208] sm:$0xf]
    %v756 = vld [vmem:[#allocation5 + $0x20c] sm:$0xf]
    %v757 = vld [vmem:[#allocation5 + $0x210] sm:$0xf]
    %v758 = vld [vmem:[#allocation5 + $0x214] sm:$0xf]
    %v759 = vld [vmem:[#allocation5 + $0x218] sm:$0xf]
    %v760 = vld [vmem:[#allocation5 + $0x21c] sm:$0xf]
    %v761 = vld [vmem:[#allocation5 + $0x220] sm:$0xf]
    %v762 = vld [vmem:[#allocation5 + $0x224] sm:$0xf]
    %v763 = vld [vmem:[#allocation5 + $0x228] sm:$0xf]
    %v764 = vld [vmem:[#allocation5 + $0x22c] sm:$0xf]
    %v765 = vld [vmem:[#allocation5 + $0x230] sm:$0xf]
    %v766 = vld [vmem:[#allocation5 + $0x234] sm:$0xf]
    %v767 = vld [vmem:[#allocation5 + $0x238] sm:$0xf]
    %v768 = vld [vmem:[#allocation5 + $0x23c] sm:$0xf]
    %v769 = vld [vmem:[%s2 + $0x1] sm:$0x1]
    %v770 = vlaneseq
    %v771 = vshrl.u32 %v770, 7
    %v772 = vsub.s32 0, %v771
    %v773 = vrot.slane %v769, %v772
    %v790 = vunpack.c.l.b16 %v753
    %v791 = vunpack.c.l.b16 %v754
    %v792 = vunpack.c.l.b16 %v755
    %v793 = vunpack.c.l.b16 %v756
    %v794 = vunpack.c.l.b16 %v757
    %v795 = vunpack.c.l.b16 %v758
    %v796 = vunpack.c.l.b16 %v759
    %v797 = vunpack.c.l.b16 %v760
    %v798 = vunpack.c.l.b16 %v761
    %v799 = vunpack.c.l.b16 %v762
    %v800 = vunpack.c.l.b16 %v763
    %v801 = vunpack.c.l.b16 %v764
    %v802 = vunpack.c.l.b16 %v765
    %v803 = vunpack.c.l.b16 %v766
    %v804 = vunpack.c.l.b16 %v767
    %v805 = vunpack.c.l.b16 %v768
    %v806 = vpack.c.b16 %v791, %v790
    %v807 = vpack.c.b16 %v793, %v792
    %v808 = vpack.c.b16 %v795, %v794
    %v809 = vpack.c.b16 %v797, %v796
    %v810 = vpack.c.b16 %v799, %v798
    %v811 = vpack.c.b16 %v801, %v800
    %v812 = vpack.c.b16 %v803, %v802
    %v813 = vpack.c.b16 %v805, %v804
    %822 = vmatprep.subr.bf16.mxu0 0
    %823 = vmatpush1.bf16.msra.mxu0 %v806
    %824 = vmatprep.subr.bf16.mxu0 0
    %825 = vmatpush1.bf16.msra.mxu0 %v807
    %826 = vmatprep.subr.bf16.mxu0 0
    %827 = vmatpush1.bf16.msra.mxu0 %v808
    %828 = vmatprep.subr.bf16.mxu0 0
    %829 = vmatpush1.bf16.msra.mxu0 %v809
    %830 = vmatprep.subr.bf16.mxu0 0
    %831 = vmatpush1.bf16.msra.mxu0 %v810
    %832 = vmatprep.subr.bf16.mxu0 0
    %833 = vmatpush1.bf16.msra.mxu0 %v811
    %834 = vmatprep.subr.bf16.mxu0 0
    %835 = vmatpush1.bf16.msra.mxu0 %v812
    %836 = vmatprep.subr.bf16.mxu0 0
    %837 = vmatpush1.bf16.msra.mxu0 %v813
    %838 = vmatprep.subr.bf16.mxu0 0
    %839 = vmatpush1.bf16.msra.mxu0 0
    %840 = vmatprep.subr.bf16.mxu0 0
    %841 = vmatpush1.bf16.msra.mxu0 0
    %842 = vmatprep.subr.bf16.mxu0 0
    %843 = vmatpush1.bf16.msra.mxu0 0
    %844 = vmatprep.subr.bf16.mxu0 0
    %845 = vmatpush1.bf16.msra.mxu0 0
    %846 = vmatprep.subr.bf16.mxu0 0
    %847 = vmatpush1.bf16.msra.mxu0 0
    %848 = vmatprep.subr.bf16.mxu0 0
    %849 = vmatpush1.bf16.msra.mxu0 0
    %850 = vmatprep.subr.bf16.mxu0 0
    %851 = vmatpush1.bf16.msra.mxu0 0
    %852 = vmatprep.subr.bf16.mxu0 0
    %853 = vmatpush1.bf16.msra.mxu0 0
    %854 = vmatprep.mubr.bf16.mxu0 0
    %855 = vmatmul.mubr.bf16.gmra.mrb[0].mxu0 %v752
    %v856 = vpop.f32.mrb[0].mxu0
    %v857 = vadd.f32 %v773, %v856
    %v858 = vpop.f32.mrb[0].mxu0
    %v859 = vpop.f32.mrb[0].mxu0
    %v860 = vpop.f32.mrb[0].mxu0
    %861 = vdwg.mxu0
    %v862 = vmax.f32 %v857, 0.0
    %v863 = vpack.c.bf16 %v862, %v862
    %v864 = vld [vmem:[#allocation5 + $0x240] sm:$0xf]
    %v865 = vld [vmem:[#allocation5 + $0x244] sm:$0xf]
    %v866 = vld [vmem:[#allocation5 + $0x248] sm:$0xf]
    %v867 = vld [vmem:[#allocation5 + $0x24c] sm:$0xf]
    %v868 = vld [vmem:[#allocation5 + $0x250] sm:$0xf]
    %v869 = vld [vmem:[#allocation5 + $0x254] sm:$0xf]
    %v870 = vld [vmem:[#allocation5 + $0x258] sm:$0xf]
    %v871 = vld [vmem:[#allocation5 + $0x25c] sm:$0xf]
    %v872 = vld [vmem:[#allocation5 + $0x260] sm:$0xf]
    %v873 = vld [vmem:[#allocation5 + $0x264] sm:$0xf]
    %v874 = vld [vmem:[#allocation5 + $0x268] sm:$0xf]
    %v875 = vld [vmem:[#allocation5 + $0x26c] sm:$0xf]
    %v876 = vld [vmem:[#allocation5 + $0x270] sm:$0xf]
    %v877 = vld [vmem:[#allocation5 + $0x274] sm:$0xf]
    %v878 = vld [vmem:[#allocation5 + $0x278] sm:$0xf]
    %v879 = vld [vmem:[#allocation5 + $0x27c] sm:$0xf]
    %v880 = vld [vmem:[%s2 + $0x2] sm:$0x1]
    %v881 = vlaneseq
    %v882 = vshrl.u32 %v881, 7
    %v883 = vsub.s32 0, %v882
    %v884 = vrot.slane %v880, %v883
    %v901 = vunpack.c.l.b16 %v864
    %v902 = vunpack.c.l.b16 %v865
    %v903 = vunpack.c.l.b16 %v866
    %v904 = vunpack.c.l.b16 %v867
    %v905 = vunpack.c.l.b16 %v868
    %v906 = vunpack.c.l.b16 %v869
    %v907 = vunpack.c.l.b16 %v870
    %v908 = vunpack.c.l.b16 %v871
    %v909 = vunpack.c.l.b16 %v872
    %v910 = vunpack.c.l.b16 %v873
    %v911 = vunpack.c.l.b16 %v874
    %v912 = vunpack.c.l.b16 %v875
    %v913 = vunpack.c.l.b16 %v876
    %v914 = vunpack.c.l.b16 %v877
    %v915 = vunpack.c.l.b16 %v878
    %v916 = vunpack.c.l.b16 %v879
    %v917 = vpack.c.b16 %v902, %v901
    %v918 = vpack.c.b16 %v904, %v903
    %v919 = vpack.c.b16 %v906, %v905
    %v920 = vpack.c.b16 %v908, %v907
    %v921 = vpack.c.b16 %v910, %v909
    %v922 = vpack.c.b16 %v912, %v911
    %v923 = vpack.c.b16 %v914, %v913
    %v924 = vpack.c.b16 %v916, %v915
    %933 = vmatprep.subr.bf16.mxu0 0
    %934 = vmatpush1.bf16.msra.mxu0 %v917
    %935 = vmatprep.subr.bf16.mxu0 0
    %936 = vmatpush1.bf16.msra.mxu0 %v918
    %937 = vmatprep.subr.bf16.mxu0 0
    %938 = vmatpush1.bf16.msra.mxu0 %v919
    %939 = vmatprep.subr.bf16.mxu0 0
    %940 = vmatpush1.bf16.msra.mxu0 %v920
    %941 = vmatprep.subr.bf16.mxu0 0
    %942 = vmatpush1.bf16.msra.mxu0 %v921
    %943 = vmatprep.subr.bf16.mxu0 0
    %944 = vmatpush1.bf16.msra.mxu0 %v922
    %945 = vmatprep.subr.bf16.mxu0 0
    %946 = vmatpush1.bf16.msra.mxu0 %v923
    %947 = vmatprep.subr.bf16.mxu0 0
    %948 = vmatpush1.bf16.msra.mxu0 %v924
    %949 = vmatprep.subr.bf16.mxu0 0
    %950 = vmatpush1.bf16.msra.mxu0 0
    %951 = vmatprep.subr.bf16.mxu0 0
    %952 = vmatpush1.bf16.msra.mxu0 0
    %953 = vmatprep.subr.bf16.mxu0 0
    %954 = vmatpush1.bf16.msra.mxu0 0
    %955 = vmatprep.subr.bf16.mxu0 0
    %956 = vmatpush1.bf16.msra.mxu0 0
    %957 = vmatprep.subr.bf16.mxu0 0
    %958 = vmatpush1.bf16.msra.mxu0 0
    %959 = vmatprep.subr.bf16.mxu0 0
    %960 = vmatpush1.bf16.msra.mxu0 0
    %961 = vmatprep.subr.bf16.mxu0 0
    %962 = vmatpush1.bf16.msra.mxu0 0
    %963 = vmatprep.subr.bf16.mxu0 0
    %964 = vmatpush1.bf16.msra.mxu0 0
    %965 = vmatprep.mubr.bf16.mxu0 0
    %966 = vmatmul.mubr.bf16.gmra.mrb[0].mxu0 %v863
    %v967 = vpop.f32.mrb[0].mxu0
    %v968 = vadd.f32 %v884, %v967
    %v969 = vpop.f32.mrb[0].mxu0
    %v970 = vpop.f32.mrb[0].mxu0
    %v971 = vpop.f32.mrb[0].mxu0
    %972 = vdwg.mxu0
    %v973 = vmax.f32 %v968, 0.0
    %v974 = vpack.c.bf16 %v973, %v973
    %v975 = vld [vmem:[#allocation5 + $0x280] sm:$0xf]
    %v976 = vld [vmem:[#allocation5 + $0x284] sm:$0xf]
    %v977 = vld [vmem:[#allocation5 + $0x288] sm:$0xf]
    %v978 = vld [vmem:[#allocation5 + $0x28c] sm:$0xf]
    %v979 = vld [vmem:[#allocation5 + $0x290] sm:$0xf]
    %v980 = vld [vmem:[#allocation5 + $0x294] sm:$0xf]
    %v981 = vld [vmem:[#allocation5 + $0x298] sm:$0xf]
    %v982 = vld [vmem:[#allocation5 + $0x29c] sm:$0xf]
    %v983 = vld [vmem:[#allocation5 + $0x2a0] sm:$0xf]
    %v984 = vld [vmem:[#allocation5 + $0x2a4] sm:$0xf]
    %v985 = vld [vmem:[#allocation5 + $0x2a8] sm:$0xf]
    %v986 = vld [vmem:[#allocation5 + $0x2ac] sm:$0xf]
    %v987 = vld [vmem:[#allocation5 + $0x2b0] sm:$0xf]
    %v988 = vld [vmem:[#allocation5 + $0x2b4] sm:$0xf]
    %v989 = vld [vmem:[#allocation5 + $0x2b8] sm:$0xf]
    %v990 = vld [vmem:[#allocation5 + $0x2bc] sm:$0xf]
    %v991 = vld [vmem:[%s2 + $0x3] sm:$0x1]
    %v992 = vlaneseq
    %v993 = vshrl.u32 %v992, 7
    %v994 = vsub.s32 0, %v993
    %v995 = vrot.slane %v991, %v994
    %v1012 = vunpack.c.l.b16 %v975
    %v1013 = vunpack.c.l.b16 %v976
    %v1014 = vunpack.c.l.b16 %v977
    %v1015 = vunpack.c.l.b16 %v978
    %v1016 = vunpack.c.l.b16 %v979
    %v1017 = vunpack.c.l.b16 %v980
    %v1018 = vunpack.c.l.b16 %v981
    %v1019 = vunpack.c.l.b16 %v982
    %v1020 = vunpack.c.l.b16 %v983
    %v1021 = vunpack.c.l.b16 %v984
    %v1022 = vunpack.c.l.b16 %v985
    %v1023 = vunpack.c.l.b16 %v986
    %v1024 = vunpack.c.l.b16 %v987
    %v1025 = vunpack.c.l.b16 %v988
    %v1026 = vunpack.c.l.b16 %v989
    %v1027 = vunpack.c.l.b16 %v990
    %v1028 = vpack.c.b16 %v1013, %v1012
    %v1029 = vpack.c.b16 %v1015, %v1014
    %v1030 = vpack.c.b16 %v1017, %v1016
    %v1031 = vpack.c.b16 %v1019, %v1018
    %v1032 = vpack.c.b16 %v1021, %v1020
    %v1033 = vpack.c.b16 %v1023, %v1022
    %v1034 = vpack.c.b16 %v1025, %v1024
    %v1035 = vpack.c.b16 %v1027, %v1026
    %1044 = vmatprep.subr.bf16.mxu0 0
    %1045 = vmatpush1.bf16.msra.mxu0 %v1028
    %1046 = vmatprep.subr.bf16.mxu0 0
    %1047 = vmatpush1.bf16.msra.mxu0 %v1029
    %1048 = vmatprep.subr.bf16.mxu0 0
    %1049 = vmatpush1.bf16.msra.mxu0 %v1030
    %1050 = vmatprep.subr.bf16.mxu0 0
    %1051 = vmatpush1.bf16.msra.mxu0 %v1031
    %1052 = vmatprep.subr.bf16.mxu0 0
    %1053 = vmatpush1.bf16.msra.mxu0 %v1032
    %1054 = vmatprep.subr.bf16.mxu0 0
    %1055 = vmatpush1.bf16.msra.mxu0 %v1033
    %1056 = vmatprep.subr.bf16.mxu0 0
    %1057 = vmatpush1.bf16.msra.mxu0 %v1034
    %1058 = vmatprep.subr.bf16.mxu0 0
    %1059 = vmatpush1.bf16.msra.mxu0 %v1035
    %1060 = vmatprep.subr.bf16.mxu0 0
    %1061 = vmatpush1.bf16.msra.mxu0 0
    %1062 = vmatprep.subr.bf16.mxu0 0
    %1063 = vmatpush1.bf16.msra.mxu0 0
    %1064 = vmatprep.subr.bf16.mxu0 0
    %1065 = vmatpush1.bf16.msra.mxu0 0
    %1066 = vmatprep.subr.bf16.mxu0 0
    %1067 = vmatpush1.bf16.msra.mxu0 0
    %1068 = vmatprep.subr.bf16.mxu0 0
    %1069 = vmatpush1.bf16.msra.mxu0 0
    %1070 = vmatprep.subr.bf16.mxu0 0
    %1071 = vmatpush1.bf16.msra.mxu0 0
    %1072 = vmatprep.subr.bf16.mxu0 0
    %1073 = vmatpush1.bf16.msra.mxu0 0
    %1074 = vmatprep.subr.bf16.mxu0 0
    %1075 = vmatpush1.bf16.msra.mxu0 0
    %1076 = vmatprep.mubr.bf16.mxu0 0
    %1077 = vmatmul.mubr.bf16.gmra.mrb[0].mxu0 %v974
    %v1078 = vpop.f32.mrb[0].mxu0
    %v1079 = vadd.f32 %v995, %v1078
    %v1080 = vpop.f32.mrb[0].mxu0
    %v1081 = vpop.f32.mrb[0].mxu0
    %v1082 = vpop.f32.mrb[0].mxu0
    %1083 = vdwg.mxu0
    %vm1084 = vcmask 261120
    %1085 = vst.msk [vmem:[#allocation7] sm:$0xff] %vm1084, %v1079
    // Predicated region
    $region22: #{tpu_custom_call.1} parent=1 // pred_check
      _
    $region23: #{tpu_custom_call.1} parent=1 // pred_check_branch
      %1087 = sbr.rel (0) target = $region25
    $region24: #{tpu_custom_call.1} parent=1 // pred_region
      %s1089 = ssub.s32 128, 128
      %1090 = vsyncadd [#allocation4], %s1089
      %s1092 = sshll.u32 [#allocation7], 4
      %s1093 = int_to_ptr.vmem [resolvable:$true] %s1092
      %1095 = dma.vmem_to_hbm [thread:$0]  %s1093, 128, %s3, [#allocation4]
    $region25: #{tpu_custom_call.1} parent=1 // pred_fallthru
      _
    // Predicated region
    $region26: #{tpu_custom_call.1} parent=1 // pred_check
      _
    $region27: #{tpu_custom_call.1} parent=1 // pred_check_branch
      %1097 = sbr.rel (0) target = $region29
    $region28: #{tpu_custom_call.1} parent=1 // pred_region
      %1098 = dma.done [#allocation4], 128
    $region29: #{tpu_custom_call.1} parent=1 // pred_fallthru
      _
    %1099 = vsyncpa [#allocation3], 1
    %1100 = vsyncpa [#allocation6], 1
    %1101 = vsyncpa [#allocation4], 1

</llo_original>
